<compile_context>
chip_gen: v7x
topology: tpu7x:2x2x1
jax: 0.10.0
libtpu: 0.0.40
codegen_flags: <defaults>
</compile_context>

<pallas_src>
import functools

import jax
import jax.numpy as jnp
from jax.experimental import pallas as pl
from jax.experimental.pallas import tpu as pltpu

_F32 = 4
_BF16 = 2
_VMEM_BUDGET = 48 << 20      # conservative vs. v7x's 64 MiB physical VMEM


def _round_up(n, m):
    return ((n + m - 1) // m) * m


def _step_vmem_bytes(block_b, in_n, hid_n, out_n, io_bytes):
    """Per-grid-step VMEM working set (double-buffered I/O, single weights)."""
    io = 2 * block_b * (in_n + out_n) * io_bytes                       # x / out tiles
    weights = (in_n * hid_n + hid_n + hid_n * out_n + out_n) * io_bytes
    casts = (block_b * in_n + in_n * hid_n                             # bf16 copies
             + block_b * hid_n + hid_n * out_n) * _BF16
    interm = block_b * (hid_n + out_n) * _F32                          # f32 h, y
    return io + weights + casts + interm


def _pick_block_b(B, in_n, hid_n, out_n, io_bytes):
    if B <= 4096:
        # Two grid steps -> both TensorCores on v7x, negligible per-step cost.
        blk = max(8, _round_up(pl.cdiv(B, 2), 8))
    else:
        # Big batches: large tiles amortize fixed per-step overhead.
        blk = 2048
    while blk > 8 and _step_vmem_bytes(blk, in_n, hid_n, out_n, io_bytes) > _VMEM_BUDGET:
        blk = max(8, _round_up(blk // 2, 8))
    return blk


def mlp_kernel(x_ref, w1_ref, b1_ref, w2_ref, b2_ref, o_ref):
    # Fused: matmul -> bias -> ReLU -> matmul -> bias -> Tanh.
    # bf16 MXU operands, f32 accumulation; epilogue entirely in f32.
    x = x_ref[...].astype(jnp.bfloat16)
    w1 = w1_ref[...].astype(jnp.bfloat16)
    h = jnp.dot(x, w1, preferred_element_type=jnp.float32)
    h = jnp.maximum(h + b1_ref[...], 0.0)                    # (1, H) bias broadcasts
    w2 = w2_ref[...].astype(jnp.bfloat16)
    y = jnp.dot(h.astype(jnp.bfloat16), w2, preferred_element_type=jnp.float32)
    y = y + b2_ref[...]
    o_ref[...] = jnp.tanh(y).astype(o_ref.dtype)             # Tanh on the EUP


@functools.partial(jax.jit, static_argnames=("block_b",))
def mlp_forward(x, w1, b1, w2, b2, *, block_b=None):
    B, in_n = x.shape
    hid_n = w1.shape[1]
    out_n = w2.shape[1]
    io_bytes = x.dtype.itemsize

    b1_2d = b1.reshape(1, hid_n)
    b2_2d = b2.reshape(1, out_n)

    if block_b is None:
        block_b = _pick_block_b(B, in_n, hid_n, out_n, io_bytes)
    grid = (pl.cdiv(B, block_b),)

    cost = pl.CostEstimate(
        flops=2 * B * (in_n * hid_n + hid_n * out_n),
        transcendentals=B * out_n,
        bytes_accessed=io_bytes * (B * in_n + in_n * hid_n + hid_n
                                   + hid_n * out_n + out_n + B * out_n),
    )

    vmem_limit = min(
        64 << 20,
        max(32 << 20,
            int(1.5 * _step_vmem_bytes(block_b, in_n, hid_n, out_n, io_bytes))),
    )

    # Constant-index weight/bias blocks: fetched once, no double buffering.
    w_buf = pl.Buffered(1)

    return pl.pallas_call(
        mlp_kernel,
        out_shape=jax.ShapeDtypeStruct((B, out_n), x.dtype),
        grid_spec=pl.GridSpec(
            grid=grid,
            in_specs=[
                # batch-tiled input; feature dim is full-extent (no padding)
                pl.BlockSpec((block_b, in_n), lambda i: (i, 0)),
                # weights / biases: full arrays, same block every step
                pl.BlockSpec((in_n, hid_n), lambda i: (0, 0), pipeline_mode=w_buf),
                pl.BlockSpec((1, hid_n), lambda i: (0, 0), pipeline_mode=w_buf),
                pl.BlockSpec((hid_n, out_n), lambda i: (0, 0), pipeline_mode=w_buf),
                pl.BlockSpec((1, out_n), lambda i: (0, 0), pipeline_mode=w_buf),
            ],
            out_specs=pl.BlockSpec((block_b, out_n), lambda i: (i, 0)),
        ),
        compiler_params=pltpu.CompilerParams(
            dimension_semantics=("parallel",),   # shard batch steps across TCs (v7x)
            vmem_limit_bytes=vmem_limit,         # v5e scoped default is only 16 MiB
        ),
        cost_estimate=cost,
    )(x, w1, b1_2d, w2, b2_2d)


def init_mlp_params(key, in_n, hidden_n, out_n, dtype=jnp.float32):
    # Deterministic init mimicking nn.Linear's default U(-1/sqrt(fan_in), +).
    k1, k2, k3, k4 = jax.random.split(key, 4)
    lim1 = 1.0 / jnp.sqrt(in_n)
    lim2 = 1.0 / jnp.sqrt(hidden_n)
    w1 = jax.random.uniform(k1, (in_n, hidden_n), dtype, -lim1, lim1)
    b1 = jax.random.uniform(k2, (1, hidden_n), dtype, -lim1, lim1)
    w2 = jax.random.uniform(k3, (hidden_n, out_n), dtype, -lim2, lim2)
    b2 = jax.random.uniform(k4, (1, out_n), dtype, -lim2, lim2)
    return w1, b1, w2, b2


if __name__ == "__main__":
    key = jax.random.PRNGKey(0)
    kx, kp = jax.random.split(key)

    B, in_n, hidden_n, out_n = 16, 32, 64, 8
    x = jax.random.normal(kx, (B, in_n), jnp.float32)
    w1, b1, w2, b2 = init_mlp_params(kp, in_n, hidden_n, out_n)

    out = mlp_forward(x, w1, b1, w2, b2)   # auto tile: 2 grid steps of 8 rows
    jax.block_until_ready(out)

    # Reference check in plain JAX (same semantics as the torch module).
    ref = jnp.tanh(jnp.maximum(x @ w1 + b1, 0.0) @ w2 + b2)
    assert out.shape == (B, out_n)
    # bf16 MXU operands (f32 accumulation) vs. a pure-f32 reference.
    err = float(jnp.max(jnp.abs(out - ref)))
    assert jnp.allclose(out, ref, atol=2e-2, rtol=2e-2), err

    print("KERNEL_OK")
</pallas_src>

<mosaic_0001>
module attributes {stable_mosaic.version = 11 : i64} {
  func.func @mlp_kernel(%arg0: i32, %arg1: memref<8x32xf32, #tpu.memory_space<vmem>>, %arg2: memref<32x64xf32, #tpu.memory_space<vmem>>, %arg3: memref<1x64xf32, #tpu.memory_space<vmem>>, %arg4: memref<64x8xf32, #tpu.memory_space<vmem>>, %arg5: memref<1x8xf32, #tpu.memory_space<vmem>>, %arg6: memref<8x8xf32, #tpu.memory_space<vmem>>) attributes {dimension_semantics = [#tpu.dimension_semantics<parallel>], iteration_bounds = array<i64: 2>, scalar_prefetch = 0 : i64, scratch_operands = 0 : i64, tpu.core_type = #tpu.core_type<tc>, window_params = [{transform_indices = @transform_0, window_bounds = array<i64: 8, 32>}, {pipeline_mode = #tpu.pipeline_mode<synchronous>, transform_indices = @transform_1, window_bounds = array<i64: 32, 64>}, {pipeline_mode = #tpu.pipeline_mode<synchronous>, transform_indices = @transform_2, window_bounds = array<i64: 1, 64>}, {pipeline_mode = #tpu.pipeline_mode<synchronous>, transform_indices = @transform_3, window_bounds = array<i64: 64, 8>}, {pipeline_mode = #tpu.pipeline_mode<synchronous>, transform_indices = @transform_4, window_bounds = array<i64: 1, 8>}, {transform_indices = @transform_5, window_bounds = array<i64: 8, 8>}]} {
    %c0 = arith.constant 0 : index
    %c0_0 = arith.constant 0 : index
    %0 = vector.load %arg1[%c0, %c0_0] : memref<8x32xf32, #tpu.memory_space<vmem>>, vector<8x32xf32>
    %1 = arith.truncf %0 : vector<8x32xf32> to vector<8x32xbf16>
    %c0_1 = arith.constant 0 : index
    %c0_2 = arith.constant 0 : index
    %2 = vector.load %arg2[%c0_1, %c0_2] : memref<32x64xf32, #tpu.memory_space<vmem>>, vector<32x64xf32>
    %3 = arith.truncf %2 : vector<32x64xf32> to vector<32x64xbf16>
    %cst = arith.constant dense<0.000000e+00> : vector<8x64xf32>
    %4 = tpu.matmul %1, %3, %cst {dimension_numbers = #tpu.dot_dimension_numbers<[1], [0], [0], [1], [0, 0, 1, 1], [], []>} : vector<8x32xbf16>, vector<32x64xbf16>, vector<8x64xf32> -> vector<8x64xf32>
    %c0_3 = arith.constant 0 : index
    %c0_4 = arith.constant 0 : index
    %5 = vector.load %arg3[%c0_3, %c0_4] : memref<1x64xf32, #tpu.memory_space<vmem>>, vector<1x64xf32>
    %6 = vector.broadcast %5 : vector<1x64xf32> to vector<8x64xf32>
    %7 = arith.addf %4, %6 : vector<8x64xf32>
    %cst_5 = arith.constant 0.000000e+00 : f32
    %8 = vector.broadcast %cst_5 : f32 to vector<8x64xf32>
    %9 = arith.maximumf %7, %8 : vector<8x64xf32>
    %c0_6 = arith.constant 0 : index
    %c0_7 = arith.constant 0 : index
    %10 = vector.load %arg4[%c0_6, %c0_7] : memref<64x8xf32, #tpu.memory_space<vmem>>, vector<64x8xf32>
    %11 = arith.truncf %10 : vector<64x8xf32> to vector<64x8xbf16>
    %12 = arith.truncf %9 : vector<8x64xf32> to vector<8x64xbf16>
    %cst_8 = arith.constant dense<0.000000e+00> : vector<8x8xf32>
    %13 = tpu.matmul %12, %11, %cst_8 {dimension_numbers = #tpu.dot_dimension_numbers<[1], [0], [0], [1], [0, 0, 1, 1], [], []>} : vector<8x64xbf16>, vector<64x8xbf16>, vector<8x8xf32> -> vector<8x8xf32>
    %c0_9 = arith.constant 0 : index
    %c0_10 = arith.constant 0 : index
    %14 = vector.load %arg5[%c0_9, %c0_10] : memref<1x8xf32, #tpu.memory_space<vmem>>, vector<1x8xf32>
    %15 = vector.broadcast %14 : vector<1x8xf32> to vector<8x8xf32>
    %16 = arith.addf %13, %15 : vector<8x8xf32>
    %17 = math.tanh %16 : vector<8x8xf32>
    %c0_11 = arith.constant 0 : index
    %c0_12 = arith.constant 0 : index
    %18 = vector.load %arg6[%c0_11, %c0_12] : memref<8x8xf32, #tpu.memory_space<vmem>>, vector<8x8xf32>
    tpu.vector_store %arg6[%c0_11, %c0_12], %17 {strides = array<i32>} : memref<8x8xf32, #tpu.memory_space<vmem>>, vector<8x8xf32>,
    return
  }
  func.func @transform_0(%arg0: i32) -> (i32, i32) {
    %c0_i32 = arith.constant 0 : i32
    %c0_i32_0 = arith.constant 0 : i32
    return %arg0, %c0_i32 : i32, i32
  }
  func.func @transform_1(%arg0: i32) -> (i32, i32) {
    %c0_i32 = arith.constant 0 : i32
    %c0_i32_0 = arith.constant 0 : i32
    %c0_i32_1 = arith.constant 0 : i32
    return %c0_i32, %c0_i32_0 : i32, i32
  }
  func.func @transform_2(%arg0: i32) -> (i32, i32) {
    %c0_i32 = arith.constant 0 : i32
    %c0_i32_0 = arith.constant 0 : i32
    %c0_i32_1 = arith.constant 0 : i32
    return %c0_i32, %c0_i32_0 : i32, i32
  }
  func.func @transform_3(%arg0: i32) -> (i32, i32) {
    %c0_i32 = arith.constant 0 : i32
    %c0_i32_0 = arith.constant 0 : i32
    %c0_i32_1 = arith.constant 0 : i32
    return %c0_i32, %c0_i32_0 : i32, i32
  }
  func.func @transform_4(%arg0: i32) -> (i32, i32) {
    %c0_i32 = arith.constant 0 : i32
    %c0_i32_0 = arith.constant 0 : i32
    %c0_i32_1 = arith.constant 0 : i32
    return %c0_i32, %c0_i32_0 : i32, i32
  }
  func.func @transform_5(%arg0: i32) -> (i32, i32) {
    %c0_i32 = arith.constant 0 : i32
    %c0_i32_0 = arith.constant 0 : i32
    return %arg0, %c0_i32 : i32, i32
  }
}

</mosaic_0001>

<llo_original>
// kernel: mlp_forward.1
$region0: #{mlp_forward.1}
  #allocation0 [shape = 'u32[]', space=smem, size = 0x4, offset = 0x4, fixed_abs, tag = 'smem constant byte address 0x4 - core index']
  #allocation1 [shape = 'u32[144,128]{1,0:T(1,128)}', space=vmem, size = 0x12000, scoped, tag = 'internal scratch']
  %s0 = inlined_call_operand.vmem [shape: f32[16,32], index: 0, kind: input, shape index: {}]
  %s1 = inlined_call_operand.vmem [shape: f32[32,64], index: 1, kind: input, shape index: {}]
  %s2 = inlined_call_operand.vmem [shape: f32[1,64], index: 2, kind: input, shape index: {}]
  %s3 = inlined_call_operand.vmem [shape: f32[64,8], index: 3, kind: input, shape index: {}]
  %s4 = inlined_call_operand.vmem [shape: f32[1,8], index: 4, kind: input, shape index: {}]
  %s5 = inlined_call_operand.vmem [shape: f32[16,8], index: 5, kind: output, shape index: {}]
  %s6 = sld [smem:[#allocation0]]
  $region53: #{mlp_forward.1} parent=0
    _
  %s8 = ssub.s32 1, %s6
  %s9 = scalar_select 0, %s8, %s6
  loop: start=0, step=1, limit=4
  $region2: #{mlp_forward.1} parent=0 // loop_pre_header
    _
  $region3: #{mlp_forward.1} parent=0 // loop_header
    %s11 = sphi 0, %s15
    %p12 = scmp.ge.s32.totalorder %s11, 4
    %s21 = sphi 0, %s23
    %s24 = sphi 0, %s21
    %s25 = sphi 0, %s24
    %s41 = sphi 0, %s25
    %s45 = sphi 0, %s45
    %s47 = sphi 0, %s45
    %s48 = sphi 0, %s47
    %s62 = sphi 0, %s48
    %s66 = sphi 0, %s66
    %s68 = sphi 0, %s66
    %s69 = sphi 0, %s68
    %s83 = sphi 0, %s69
    %s87 = sphi 0, %s87
    %s89 = sphi 0, %s87
    %s90 = sphi 0, %s89
    %s104 = sphi 0, %s90
    %s108 = sphi 0, %s108
    %s110 = sphi 0, %s108
    %s111 = sphi 0, %s110
    %s125 = sphi 0, %s111
    %s131 = sphi 0, %s133
    %s134 = sphi 0, %s131
    %s135 = sphi 0, %s134
    %s151 = sphi 0, %s135
  $region4: #{mlp_forward.1} parent=0 // loop_header_branch
    %14 = sbr.rel (%p12) target = $region8
  $region5: #{mlp_forward.1} parent=0 // loop_body
    %s16 = ssub.s32 %s11, 1
    %s17 = ssub.s32 %s11, 2
    %s18 = sadd.s32 %s11, 1
    %s19 = ssub.s32 %s11, %s18
    %p20 = scmp.eq.s32.totalorder %s19, 0
    %s22 = sadd.s32 %s21, 1
    %s23 = scalar_select %p20, %s21, %s22
    %p26 = pneg %p20
    %p27 = scmp.eq.s32.totalorder %s11, 1
    %p28 = por %p26, %p27
    %p29 = scmp.ne.s32.totalorder %s21, %s24
    %p30 = scmp.eq.s32.totalorder %s11, 0
    %p31 = por %p29, %p30
    %p32 = scmp.ne.s32.totalorder %s21, %s24
    %p33 = scmp.eq.s32.totalorder %s16, 1
    %p34 = por %p32, %p33
    %p35 = scmp.ne.s32.totalorder %s24, %s25
    %p36 = scmp.eq.s32.totalorder %s16, 0
    %p37 = por %p35, %p36
    %p38 = scmp.ne.s32.totalorder %s24, %s25
    %p39 = scmp.eq.s32.totalorder %s17, 1
    %p40 = por %p38, %p39
    %p42 = scmp.ne.s32.totalorder %s25, %s41
    %p43 = scmp.eq.s32.totalorder %s17, 0
    %p44 = por %p42, %p43
    %s46 = sadd.s32 %s45, 1
    %p49 = scmp.eq.s32.totalorder %s11, 1
    %p50 = scmp.ne.s32.totalorder %s45, %s47
    %p51 = scmp.eq.s32.totalorder %s11, 0
    %p52 = por %p50, %p51
    %p53 = scmp.ne.s32.totalorder %s45, %s47
    %p54 = scmp.eq.s32.totalorder %s16, 1
    %p55 = por %p53, %p54
    %p56 = scmp.ne.s32.totalorder %s47, %s48
    %p57 = scmp.eq.s32.totalorder %s16, 0
    %p58 = por %p56, %p57
    %p59 = scmp.ne.s32.totalorder %s47, %s48
    %p60 = scmp.eq.s32.totalorder %s17, 1
    %p61 = por %p59, %p60
    %p63 = scmp.ne.s32.totalorder %s48, %s62
    %p64 = scmp.eq.s32.totalorder %s17, 0
    %p65 = por %p63, %p64
    %s67 = sadd.s32 %s66, 1
    %p70 = scmp.eq.s32.totalorder %s11, 1
    %p71 = scmp.ne.s32.totalorder %s66, %s68
    %p72 = scmp.eq.s32.totalorder %s11, 0
    %p73 = por %p71, %p72
    %p74 = scmp.ne.s32.totalorder %s66, %s68
    %p75 = scmp.eq.s32.totalorder %s16, 1
    %p76 = por %p74, %p75
    %p77 = scmp.ne.s32.totalorder %s68, %s69
    %p78 = scmp.eq.s32.totalorder %s16, 0
    %p79 = por %p77, %p78
    %p80 = scmp.ne.s32.totalorder %s68, %s69
    %p81 = scmp.eq.s32.totalorder %s17, 1
    %p82 = por %p80, %p81
    %p84 = scmp.ne.s32.totalorder %s69, %s83
    %p85 = scmp.eq.s32.totalorder %s17, 0
    %p86 = por %p84, %p85
    %s88 = sadd.s32 %s87, 1
    %p91 = scmp.eq.s32.totalorder %s11, 1
    %p92 = scmp.ne.s32.totalorder %s87, %s89
    %p93 = scmp.eq.s32.totalorder %s11, 0
    %p94 = por %p92, %p93
    %p95 = scmp.ne.s32.totalorder %s87, %s89
    %p96 = scmp.eq.s32.totalorder %s16, 1
    %p97 = por %p95, %p96
    %p98 = scmp.ne.s32.totalorder %s89, %s90
    %p99 = scmp.eq.s32.totalorder %s16, 0
    %p100 = por %p98, %p99
    %p101 = scmp.ne.s32.totalorder %s89, %s90
    %p102 = scmp.eq.s32.totalorder %s17, 1
    %p103 = por %p101, %p102
    %p105 = scmp.ne.s32.totalorder %s90, %s104
    %p106 = scmp.eq.s32.totalorder %s17, 0
    %p107 = por %p105, %p106
    %s109 = sadd.s32 %s108, 1
    %p112 = scmp.eq.s32.totalorder %s11, 1
    %p113 = scmp.ne.s32.totalorder %s108, %s110
    %p114 = scmp.eq.s32.totalorder %s11, 0
    %p115 = por %p113, %p114
    %p116 = scmp.ne.s32.totalorder %s108, %s110
    %p117 = scmp.eq.s32.totalorder %s16, 1
    %p118 = por %p116, %p117
    %p119 = scmp.ne.s32.totalorder %s110, %s111
    %p120 = scmp.eq.s32.totalorder %s16, 0
    %p121 = por %p119, %p120
    %p122 = scmp.ne.s32.totalorder %s110, %s111
    %p123 = scmp.eq.s32.totalorder %s17, 1
    %p124 = por %p122, %p123
    %p126 = scmp.ne.s32.totalorder %s111, %s125
    %p127 = scmp.eq.s32.totalorder %s17, 0
    %p128 = por %p126, %p127
    %s129 = ssub.s32 %s11, %s18
    %p130 = scmp.eq.s32.totalorder %s129, 0
    %s132 = sadd.s32 %s131, 1
    %s133 = scalar_select %p130, %s131, %s132
    %p136 = pneg %p130
    %p137 = scmp.eq.s32.totalorder %s11, 1
    %p138 = por %p136, %p137
    %p139 = scmp.ne.s32.totalorder %s131, %s134
    %p140 = scmp.eq.s32.totalorder %s11, 0
    %p141 = por %p139, %p140
    %p142 = scmp.ne.s32.totalorder %s131, %s134
    %p143 = scmp.eq.s32.totalorder %s16, 1
    %p144 = por %p142, %p143
    %p145 = scmp.ne.s32.totalorder %s134, %s135
    %p146 = scmp.eq.s32.totalorder %s16, 0
    %p147 = por %p145, %p146
    %p148 = scmp.ne.s32.totalorder %s134, %s135
    %p149 = scmp.eq.s32.totalorder %s17, 1
    %p150 = por %p148, %p149
    %p152 = scmp.ne.s32.totalorder %s135, %s151
    %p153 = scmp.eq.s32.totalorder %s17, 0
    %p154 = por %p152, %p153
    %p155 = scmp.le.s32.totalorder 1, %s11
    %p156 = scmp.lt.s32.totalorder %s11, 3
    %p157 = pnand %p155, %p156
    %p158 = pneg %p157
    // Predicated region
    $region9: #{mlp_forward.1} parent=5 // pred_check
      _
    $region10: #{mlp_forward.1} parent=5 // pred_check_branch
      %160 = sbr.rel (%p157) target = $region12
    $region11: #{mlp_forward.1} parent=5 // pred_region
      %s161 = ssub.s32 %s11, 1
      // Predicated region
      $region13: #{mlp_forward.1} parent=11 // pred_check
        %p162 = pneg %p58
      $region14: #{mlp_forward.1} parent=11 // pred_check_branch
        %164 = sbr.rel (%p162) target = $region16
      $region15: #{mlp_forward.1} parent=11 // pred_region
        _
      $region16: #{mlp_forward.1} parent=11 // pred_fallthru
        _
      // Predicated region
      $region17: #{mlp_forward.1} parent=11 // pred_check
        %p165 = pneg %p79
      $region18: #{mlp_forward.1} parent=11 // pred_check_branch
        %167 = sbr.rel (%p165) target = $region20
      $region19: #{mlp_forward.1} parent=11 // pred_region
        _
      $region20: #{mlp_forward.1} parent=11 // pred_fallthru
        _
      // Predicated region
      $region21: #{mlp_forward.1} parent=11 // pred_check
        %p168 = pneg %p100
      $region22: #{mlp_forward.1} parent=11 // pred_check_branch
        %170 = sbr.rel (%p168) target = $region24
      $region23: #{mlp_forward.1} parent=11 // pred_region
        _
      $region24: #{mlp_forward.1} parent=11 // pred_fallthru
        _
      // Predicated region
      $region25: #{mlp_forward.1} parent=11 // pred_check
        %p171 = pneg %p121
      $region26: #{mlp_forward.1} parent=11 // pred_check_branch
        %173 = sbr.rel (%p171) target = $region28
      $region27: #{mlp_forward.1} parent=11 // pred_region
        _
      $region28: #{mlp_forward.1} parent=11 // pred_fallthru
        _
    $region12: #{mlp_forward.1} parent=5 // pred_fallthru
      _
    %p174 = scmp.lt.s32.totalorder %s11, 2
    // Predicated region
    $region29: #{mlp_forward.1} parent=5 // pred_check
      %p175 = pneg %p174
    $region30: #{mlp_forward.1} parent=5 // pred_check_branch
      %177 = sbr.rel (%p175) target = $region32
    $region31: #{mlp_forward.1} parent=5 // pred_region
      // Predicated region
      $region33: #{mlp_forward.1} parent=31 // pred_check
        %p178 = pneg %p31
      $region34: #{mlp_forward.1} parent=31 // pred_check_branch
        %180 = sbr.rel (%p178) target = $region36
      $region35: #{mlp_forward.1} parent=31 // pred_region
        %p181 = scmp.lt.s32.totalorder %s11, 1
        %s182 = scalar_select %p181, %s11, 1
        %s183 = smul.addr %s182, 8
        %s184 = scalar_lea.vmem %s0, %s183
      $region36: #{mlp_forward.1} parent=31 // pred_fallthru
        _
    $region32: #{mlp_forward.1} parent=5 // pred_fallthru
      _
    %p185 = scmp.le.s32.totalorder 1, %s11
    %p186 = scmp.lt.s32.totalorder %s11, 3
    %p187 = pnand %p185, %p186
    %p188 = pneg %p187
    // Predicated region
    $region37: #{mlp_forward.1} parent=5 // pred_check
      _
    $region38: #{mlp_forward.1} parent=5 // pred_check_branch
      %190 = sbr.rel (%p187) target = $region40
    $region39: #{mlp_forward.1} parent=5 // pred_region
      %s191 = ssub.s32 %s11, 1
      %p192 = scmp.lt.s32.totalorder %s16, 1
      %s193 = scalar_select %p192, %s16, 1
      %s194 = smul.addr %s193, 8
      %s195 = scalar_lea.vmem %s0, %s194
      %p196 = pneg %p37
      %p197 = pneg %p34
      %p198 = pneg %p58
      %p199 = pneg %p55
      %p200 = pneg %p79
      %p201 = pneg %p76
      %p202 = pneg %p100
      %p203 = pneg %p97
      %p204 = pneg %p121
      %p205 = pneg %p118
      %p206 = pneg %p147
      %p207 = pneg %p144
      %p208 = scmp.lt.s32.totalorder %s16, 1
      %s209 = scalar_select %p208, %s16, 1
      %s210 = smul.addr %s209, 8
      %s211 = scalar_lea.vmem %s5, %s210
      %p212 = scmp.lt.s32.totalorder %s16, 1
      %s213 = scalar_select %p212, %s16, 1
      %s214 = smul.addr %s213, 8
      %s215 = scalar_lea.vmem %s0, %s214
      %p216 = scmp.lt.s32.totalorder %s16, 1
      %s217 = scalar_select %p216, %s16, 1
      %s218 = smul.addr %s217, 8
      %s219 = scalar_lea.vmem %s5, %s218
      %v221 = vld [vmem:[%s215] sm:$0xff]
      %v222 = vpack.c.bf16 %v221, %v221
      %v223 = vld [vmem:[%s1] sm:$0xff]
      %v224 = vld [vmem:[%s1 + $0x8] sm:$0xff]
      %v225 = vld [vmem:[%s1 + $0x10] sm:$0xff]
      %v226 = vld [vmem:[%s1 + $0x18] sm:$0xff]
      %v227 = vpack.c.bf16 %v224, %v223
      %v228 = vpack.c.bf16 %v226, %v225
      %v229 = vld [vmem:[%s2] sm:$0x1]
      %v231 = vlaneseq
      %v232 = vshrl.u32 %v231, 7
      %v233 = vsub.s32 0, %v232
      %v234 = vrot.slane %v229, %v233
      %vm236 = vcmask 261120
      %v238 = vsel %vm236, %v222, 0
      %240 = vmatprep.subr.bf16.mxu0 0
      %241 = vmatpush1.bf16.msra.mxu0 %v227
      %242 = vmatprep.subr.bf16.mxu0 0
      %243 = vmatpush1.bf16.msra.mxu0 %v228
      %244 = vmatprep.subr.bf16.mxu0 0
      %245 = vmatpush1.bf16.msra.mxu0 0
      %246 = vmatprep.subr.bf16.mxu0 0
      %247 = vmatpush1.bf16.msra.mxu0 0
      %248 = vmatprep.subr.bf16.mxu0 0
      %249 = vmatpush1.bf16.msra.mxu0 0
      %250 = vmatprep.subr.bf16.mxu0 0
      %251 = vmatpush1.bf16.msra.mxu0 0
      %252 = vmatprep.subr.bf16.mxu0 0
      %253 = vmatpush1.bf16.msra.mxu0 0
      %254 = vmatprep.subr.bf16.mxu0 0
      %255 = vmatpush1.bf16.msra.mxu0 0
      %256 = vmatprep.subr.bf16.mxu0 0
      %257 = vmatpush1.bf16.msra.mxu0 0
      %258 = vmatprep.subr.bf16.mxu0 0
      %259 = vmatpush1.bf16.msra.mxu0 0
      %260 = vmatprep.subr.bf16.mxu0 0
      %261 = vmatpush1.bf16.msra.mxu0 0
      %262 = vmatprep.subr.bf16.mxu0 0
      %263 = vmatpush1.bf16.msra.mxu0 0
      %264 = vmatprep.subr.bf16.mxu0 0
      %265 = vmatpush1.bf16.msra.mxu0 0
      %266 = vmatprep.subr.bf16.mxu0 0
      %267 = vmatpush1.bf16.msra.mxu0 0
      %268 = vmatprep.subr.bf16.mxu0 0
      %269 = vmatpush1.bf16.msra.mxu0 0
      %270 = vmatprep.subr.bf16.mxu0 0
      %271 = vmatpush1.bf16.msra.mxu0 0
      %272 = vmatprep.mubr.bf16.mxu0 0
      %273 = vmatmul.mubr.bf16.gmra.mrb[0].mxu0 %v238
      %v274 = vpop.f32.mrb[0].mxu0
      %v275 = vadd.f32 %v234, %v274
      %v276 = vpop.f32.mrb[0].mxu0
      %v277 = vpop.f32.mrb[0].mxu0
      %v278 = vpop.f32.mrb[0].mxu0
      %279 = vdwg.mxu0
      %v280 = vmax.f32 %v275, 0.0
      %v281 = vld [vmem:[%s3] sm:$0xff]
      %v282 = vld [vmem:[%s3 + $0x8] sm:$0xff]
      %v283 = vld [vmem:[%s3 + $0x10] sm:$0xff]
      %v284 = vld [vmem:[%s3 + $0x18] sm:$0xff]
      %v285 = vld [vmem:[%s3 + $0x20] sm:$0xff]
      %v286 = vld [vmem:[%s3 + $0x28] sm:$0xff]
      %v287 = vld [vmem:[%s3 + $0x30] sm:$0xff]
      %v288 = vld [vmem:[%s3 + $0x38] sm:$0xff]
      %v289 = vpack.c.bf16 %v282, %v281
      %v290 = vpack.c.bf16 %v284, %v283
      %v291 = vpack.c.bf16 %v286, %v285
      %v292 = vpack.c.bf16 %v288, %v287
      %v293 = vpack.c.bf16 %v280, %v280
      %v294 = vld [vmem:[%s4] sm:$0x1]
      %v296 = vlaneseq
      %v297 = vshrl.u32 %v296, 7
      %v298 = vsub.s32 0, %v297
      %v299 = vrot.slane %v294, %v298
      %vm301 = vcmask 523264
      %v303 = vsel %vm301, %v293, 0
      %305 = vmatprep.subr.bf16.mxu0 0
      %306 = vmatpush1.bf16.msra.mxu0 %v289
      %307 = vmatprep.subr.bf16.mxu0 0
      %308 = vmatpush1.bf16.msra.mxu0 %v290
      %309 = vmatprep.subr.bf16.mxu0 0
      %310 = vmatpush1.bf16.msra.mxu0 %v291
      %311 = vmatprep.subr.bf16.mxu0 0
      %312 = vmatpush1.bf16.msra.mxu0 %v292
      %313 = vmatprep.subr.bf16.mxu0 0
      %314 = vmatpush1.bf16.msra.mxu0 0
      %315 = vmatprep.subr.bf16.mxu0 0
      %316 = vmatpush1.bf16.msra.mxu0 0
      %317 = vmatprep.subr.bf16.mxu0 0
      %318 = vmatpush1.bf16.msra.mxu0 0
      %319 = vmatprep.subr.bf16.mxu0 0
      %320 = vmatpush1.bf16.msra.mxu0 0
      %321 = vmatprep.subr.bf16.mxu0 0
      %322 = vmatpush1.bf16.msra.mxu0 0
      %323 = vmatprep.subr.bf16.mxu0 0
      %324 = vmatpush1.bf16.msra.mxu0 0
      %325 = vmatprep.subr.bf16.mxu0 0
      %326 = vmatpush1.bf16.msra.mxu0 0
      %327 = vmatprep.subr.bf16.mxu0 0
      %328 = vmatpush1.bf16.msra.mxu0 0
      %329 = vmatprep.subr.bf16.mxu0 0
      %330 = vmatpush1.bf16.msra.mxu0 0
      %331 = vmatprep.subr.bf16.mxu0 0
      %332 = vmatpush1.bf16.msra.mxu0 0
      %333 = vmatprep.subr.bf16.mxu0 0
      %334 = vmatpush1.bf16.msra.mxu0 0
      %335 = vmatprep.subr.bf16.mxu0 0
      %336 = vmatpush1.bf16.msra.mxu0 0
      %337 = vmatprep.mubr.bf16.mxu0 0
      %338 = vmatmul.mubr.bf16.gmra.mrb[0].mxu0 %v303
      %v339 = vpop.f32.mrb[0].mxu0
      %v340 = vadd.f32 %v299, %v339
      %v341 = vpop.f32.mrb[0].mxu0
      %v342 = vpop.f32.mrb[0].mxu0
      %v343 = vpop.f32.mrb[0].mxu0
      %344 = vdwg.mxu0
      %v345 = vtanh.pop %v340
      %vm346 = vcmask 64512
      %347 = vst.msk [vmem:[%s219] sm:$0xff] %vm346, %v345
      %p348 = scmp.lt.s32.totalorder %s16, 1
      %s349 = scalar_select %p348, %s16, 1
      %s350 = smul.addr %s349, 8
      %s351 = scalar_lea.vmem %s5, %s350
      // Predicated region
      $region41: #{mlp_forward.1} parent=39 // pred_check
        %p352 = pneg %p144
      $region42: #{mlp_forward.1} parent=39 // pred_check_branch
        %354 = sbr.rel (%p352) target = $region44
      $region43: #{mlp_forward.1} parent=39 // pred_region
        _
      $region44: #{mlp_forward.1} parent=39 // pred_fallthru
        _
    $region40: #{mlp_forward.1} parent=5 // pred_fallthru
      _
    %p355 = scmp.le.s32.totalorder 2, %s11
    // Predicated region
    $region45: #{mlp_forward.1} parent=5 // pred_check
      %p356 = pneg %p355
    $region46: #{mlp_forward.1} parent=5 // pred_check_branch
      %358 = sbr.rel (%p356) target = $region48
    $region47: #{mlp_forward.1} parent=5 // pred_region
      %s359 = ssub.s32 %s11, 2
      // Predicated region
      $region49: #{mlp_forward.1} parent=47 // pred_check
        %p360 = pneg %p150
      $region50: #{mlp_forward.1} parent=47 // pred_check_branch
        %362 = sbr.rel (%p360) target = $region52
      $region51: #{mlp_forward.1} parent=47 // pred_region
        %p363 = scmp.lt.s32.totalorder %s17, 1
        %s364 = scalar_select %p363, %s17, 1
        %s365 = smul.addr %s364, 8
        %s366 = scalar_lea.vmem %s5, %s365
      $region52: #{mlp_forward.1} parent=47 // pred_fallthru
        _
    $region48: #{mlp_forward.1} parent=5 // pred_fallthru
      _
  $region6: #{mlp_forward.1} parent=0 // loop_footer
    %s15 = sadd.s32 1, %s11
  $region7: #{mlp_forward.1} parent=0 // loop_footer_branch
    %10 = sbr.rel target = $region3
  $region8: #{mlp_forward.1} parent=0 // loop_exit
    _

</llo_original>
